<compile_context>
chip_gen: v5e
topology: v5e:2x2
jax: 0.10.0
libtpu: 0.0.40
codegen_flags: <defaults>
</compile_context>

<pallas_src>
import functools

import jax
import jax.numpy as jnp
from jax.experimental import pallas as pl
from jax.experimental.pallas import tpu as pltpu

_MIB = 1024 * 1024


def _round_up(x, m):
    return (x + m - 1) // m * m


def _cdiv(a, b):
    return (a + b - 1) // b


def _vmem_capacity_bytes():
    """Physical VMEM per TensorCore; conservative 64 MiB (v7x-sized) fallback."""
    try:
        info = pltpu.get_tpu_info()
        for attr in ("vmem_capacity_bytes", "vmem_size_bytes", "vmem_bytes"):
            v = getattr(info, attr, None)
            if v:
                return int(v)
    except Exception:
        pass
    return 64 * _MIB


def _weight_spec(shape, index_map):
    """Constant-index weight block; single-buffer it when the API supports Buffered(1)."""
    if hasattr(pl, "Buffered"):
        try:
            return pl.BlockSpec(shape, index_map, pipeline_mode=pl.Buffered(1))
        except TypeError:
            pass
    return pl.BlockSpec(shape, index_map)


# ----------------------------- kernels -----------------------------------------


def _make_resident_kernel(n_chunks, chunk_f):
    """Weights fully resident in VMEM; d_ff processed in chunk_f-wide static slices."""

    def kernel(x_ref, wi_ref, wo_ref, o_ref, acc_ref):
        x = x_ref[...].astype(wi_ref.dtype)  # cast activations in-kernel (no extra HBM pass)
        for c in range(n_chunks):            # static unroll; n_chunks is small by construction
            lo = c * chunk_f
            h = jnp.dot(x, wi_ref[:, lo:lo + chunk_f],
                        preferred_element_type=jnp.float32)
            h = jnp.maximum(h, 0.0)
            # TODO(synk): training-time dropout between relu and wo omitted (identity at inference).
            part = jnp.dot(h.astype(wo_ref.dtype), wo_ref[lo:lo + chunk_f, :],
                           preferred_element_type=jnp.float32)
            if c == 0:
                acc_ref[...] = part
            else:
                acc_ref[...] += part
        o_ref[...] = acc_ref[...].astype(o_ref.dtype)

    return kernel


def _ffn_tiled_kernel(x_ref, wi_ref, wo_ref, o_ref, acc_ref):
    """d_ff tiled as an innermost reduction axis; partial products accumulated in f32."""
    f = pl.program_id(1)

    @pl.when(f == 0)
    def _():
        acc_ref[...] = jnp.zeros_like(acc_ref)

    x = x_ref[...].astype(wi_ref.dtype)
    h = jnp.dot(x, wi_ref[...], preferred_element_type=jnp.float32)
    h = jnp.maximum(h, 0.0)
    acc_ref[...] += jnp.dot(h.astype(wo_ref.dtype), wo_ref[...],
                            preferred_element_type=jnp.float32)

    @pl.when(f == pl.num_programs(1) - 1)
    def _():
        o_ref[...] = acc_ref[...].astype(o_ref.dtype)


# ----------------------------- wrapper ------------------------------------------


@functools.partial(jax.jit, static_argnames=("tile_m", "tile_f", "compute_dtype"))
def t5_dense_relu_dense(hidden_states, wi, wo, *, tile_m=None, tile_f=None,
                        compute_dtype=jnp.bfloat16):
    """hidden_states: [..., d_model]; wi: [d_model, d_ff]; wo: [d_ff, d_model]."""
    orig_shape = hidden_states.shape
    d_model = orig_shape[-1]
    d_ff = wi.shape[1]
    out_dtype = hidden_states.dtype

    x = hidden_states.reshape(-1, d_model)           # keep input dtype; cast inside kernel
    # TODO(synk): in a real model, pre-cast / cache bf16 weights instead of casting per call.
    wi_c = wi.astype(compute_dtype)
    wo_c = wo.astype(compute_dtype)
    M = x.shape[0]
    w_isz = jnp.dtype(compute_dtype).itemsize
    x_isz = jnp.dtype(x.dtype).itemsize
    o_isz = jnp.dtype(out_dtype).itemsize

    # ---- generation-aware VMEM budgets ----
    vmem_cap = _vmem_capacity_bytes()
    if vmem_cap >= 100 * _MIB:          # v5e / v6e: 128 MiB per TensorCore
        resident_budget, tiled_budget, vmem_limit_cap = 96 * _MIB, 88 * _MIB, 110 * _MIB
        tiled_tile_m_default = 1024
    else:                               # v7x (64 MiB per TC) or unknown
        resident_budget, tiled_budget, vmem_limit_cap = 44 * _MIB, 40 * _MIB, 54 * _MIB
        tiled_tile_m_default = 512

    def _pick_tile_m(default):
        tm = int(tile_m) if tile_m is not None else default
        tm = _round_up(max(16, min(tm, _round_up(M, 16))), 16)
        # Megacore: prefer >= 2 steps on the parallel M axis so both v7x TCs get work.
        if M > 16 and _cdiv(M, tm) < 2:
            tm = _round_up(max(16, _cdiv(M, 2)), 16)
        return tm

    # ---- resident-path candidate tiling ----
    res_tile_m = _pick_tile_m(256)
    # d_ff chunk width inside the resident kernel (static unroll, bounded chunk count).
    chunk_f = max(512, _round_up(_cdiv(d_ff, 32), 128))
    chunk_f = min(chunk_f, _round_up(d_ff, 128))
    d_ff_res = _round_up(d_ff, chunk_f)
    n_chunks = d_ff_res // chunk_f

    resident_bytes = (
        2 * d_model * d_ff_res * w_isz                   # wi + wo, single-buffered
        + 2 * res_tile_m * d_model * (x_isz + o_isz)     # x / out tiles, double-buffered
        + res_tile_m * d_model * (4 + w_isz)             # f32 accumulator + bf16 x copy
        + res_tile_m * chunk_f * (4 + w_isz)             # h chunk (f32) + bf16 copy
    )
    use_resident = resident_bytes <= resident_budget

    if use_resident:
        tm = res_tile_m
        m_pad = _round_up(M, tm)
        x_p = jnp.pad(x, ((0, m_pad - M), (0, 0))) if m_pad != M else x
        if d_ff_res != d_ff:
            # Zero-padding d_ff is exact: relu(0) = 0 and the extra wo rows are zero.
            wi_c = jnp.pad(wi_c, ((0, 0), (0, d_ff_res - d_ff)))
            wo_c = jnp.pad(wo_c, ((0, d_ff_res - d_ff), (0, 0)))

        cost = pl.CostEstimate(
            flops=4 * m_pad * d_model * d_ff_res,
            transcendentals=0,
            bytes_accessed=int(m_pad * d_model * (x_isz + o_isz)
                               + 2 * d_model * d_ff_res * w_isz),
        )
        out = pl.pallas_call(
            _make_resident_kernel(n_chunks, chunk_f),
            out_shape=jax.ShapeDtypeStruct((m_pad, d_model), out_dtype),
            grid_spec=pltpu.PrefetchScalarGridSpec(
                num_scalar_prefetch=0,
                grid=(m_pad // tm,),
                in_specs=[
                    pl.BlockSpec((tm, d_model), lambda i: (i, 0)),
                    # Constant index map => fetched once, stays resident (single buffer).
                    _weight_spec((d_model, d_ff_res), lambda i: (0, 0)),
                    _weight_spec((d_ff_res, d_model), lambda i: (0, 0)),
                ],
                out_specs=pl.BlockSpec((tm, d_model), lambda i: (i, 0)),
                scratch_shapes=[pltpu.VMEM((tm, d_model), jnp.float32)],
            ),
            compiler_params=pltpu.CompilerParams(
                dimension_semantics=("parallel",),
                vmem_limit_bytes=int(min(max(resident_bytes + 12 * _MIB, 32 * _MIB),
                                         vmem_limit_cap)),
            ),
            cost_estimate=cost,
        )(x_p, wi_c, wo_c)
    else:
        # ---- weight-streaming path: d_ff tiled as innermost reduction axis ----
        tm = _pick_tile_m(tiled_tile_m_default)
        tf = int(tile_f) if tile_f is not None else 512
        tf = _round_up(max(256, min(tf, _round_up(d_ff, 128))), 128)

        def _tiled_bytes(tm_, tf_):
            return (
                2 * 2 * d_model * tf_ * w_isz               # wi + wo blocks, double-buffered
                + 2 * tm_ * d_model * (x_isz + o_isz)       # x / out tiles, double-buffered
                + tm_ * d_model * (4 + w_isz)               # f32 accumulator + bf16 x copy
                + tm_ * tf_ * (4 + w_isz)                   # h (f32) + bf16 copy
            )

        # Shrink tile_f first (floor 256), then tile_m (multiples of 128, then 16).
        while _tiled_bytes(tm, tf) > tiled_budget and tf > 256:
            tf = max(256, _round_up(tf // 2, 128))
        while _tiled_bytes(tm, tf) > tiled_budget and tm > 128:
            tm = max(128, _round_up(tm // 2, 128))
        while _tiled_bytes(tm, tf) > tiled_budget and tm > 16:
            tm = max(16, _round_up(tm // 2, 16))
        tiled_bytes = _tiled_bytes(tm, tf)

        m_pad = _round_up(M, tm)
        d_ff_pad = _round_up(d_ff, tf)
        x_p = jnp.pad(x, ((0, m_pad - M), (0, 0))) if m_pad != M else x
        if d_ff_pad != d_ff:
            wi_c = jnp.pad(wi_c, ((0, 0), (0, d_ff_pad - d_ff)))
            wo_c = jnp.pad(wo_c, ((0, d_ff_pad - d_ff), (0, 0)))

        grid_m = m_pad // tm
        cost = pl.CostEstimate(
            flops=4 * m_pad * d_model * d_ff_pad,
            transcendentals=0,
            bytes_accessed=int(m_pad * d_model * (x_isz + o_isz)
                               + grid_m * 2 * d_model * d_ff_pad * w_isz),
        )
        out = pl.pallas_call(
            _ffn_tiled_kernel,
            out_shape=jax.ShapeDtypeStruct((m_pad, d_model), out_dtype),
            grid_spec=pltpu.PrefetchScalarGridSpec(
                num_scalar_prefetch=0,
                grid=(grid_m, d_ff_pad // tf),
                in_specs=[
                    pl.BlockSpec((tm, d_model), lambda i, f: (i, 0)),
                    pl.BlockSpec((d_model, tf), lambda i, f: (0, f)),
                    pl.BlockSpec((tf, d_model), lambda i, f: (f, 0)),
                ],
                out_specs=pl.BlockSpec((tm, d_model), lambda i, f: (i, 0)),
                scratch_shapes=[pltpu.VMEM((tm, d_model), jnp.float32)],
            ),
            compiler_params=pltpu.CompilerParams(
                dimension_semantics=("parallel", "arbitrary"),
                vmem_limit_bytes=int(min(max(tiled_bytes + 12 * _MIB, 32 * _MIB),
                                         vmem_limit_cap)),
            ),
            cost_estimate=cost,
        )(x_p, wi_c, wo_c)

    if out.shape[0] != M:
        out = out[:M]
    return out.reshape(orig_shape)


if __name__ == "__main__":
    # Small synthetic config: batch=2, seq=8, d_model=128, d_ff=256.
    B, S, d_model, d_ff = 2, 8, 128, 256

    key = jax.random.PRNGKey(0)
    kx, kwi, kwo = jax.random.split(key, 3)

    x = jax.random.normal(kx, (B, S, d_model), dtype=jnp.float32)
    # Deterministic init; stored as [in, out] (transpose of nn.Linear.weight).
    wi = jax.random.normal(kwi, (d_model, d_ff), dtype=jnp.float32) * 0.02
    wo = jax.random.normal(kwo, (d_ff, d_model), dtype=jnp.float32) * 0.02

    out = t5_dense_relu_dense(x, wi, wo)
    out = jax.block_until_ready(out)
    assert out.shape == (B, S, d_model)
    assert out.dtype == x.dtype

    # Reference 1: pure f32 math (dropout identity at inference); bf16 compute => loose tol.
    ref_f32 = jnp.maximum(x @ wi, 0.0) @ wo
    assert jnp.allclose(out, ref_f32, atol=1e-2, rtol=5e-2), float(
        jnp.max(jnp.abs(out - ref_f32))
    )

    # Reference 2: same bf16-operand / f32-accumulate arithmetic as the kernel (tight tol).
    xb, wib, wob = (a.astype(jnp.bfloat16) for a in (x, wi, wo))
    hb = jnp.maximum(jnp.dot(xb, wib, preferred_element_type=jnp.float32), 0.0)
    ref_bf16 = jnp.dot(
        hb.astype(jnp.bfloat16), wob, preferred_element_type=jnp.float32
    ).astype(jnp.float32)
    assert jnp.allclose(out, ref_bf16, atol=2e-3, rtol=2e-3), float(
        jnp.max(jnp.abs(out - ref_bf16))
    )

    print("KERNEL_OK")
</pallas_src>

<mosaic_0001>
module attributes {stable_mosaic.version = 11 : i64} {
  func.func @kernel(%arg0: i32, %arg1: memref<16x128xf32, #tpu.memory_space<vmem>>, %arg2: memref<128x256xbf16, #tpu.memory_space<vmem>>, %arg3: memref<256x128xbf16, #tpu.memory_space<vmem>>, %arg4: memref<16x128xf32, #tpu.memory_space<vmem>>, %arg5: memref<16x128xf32, #tpu.memory_space<vmem>>) attributes {dimension_semantics = [#tpu.dimension_semantics<parallel>], iteration_bounds = array<i64: 1>, scalar_prefetch = 0 : i64, scratch_operands = 1 : i64, tpu.core_type = #tpu.core_type<tc>, window_params = [{transform_indices = @transform_0, window_bounds = array<i64: 16, 128>}, {pipeline_mode = #tpu.pipeline_mode<synchronous>, transform_indices = @transform_1, window_bounds = array<i64: 128, 256>}, {pipeline_mode = #tpu.pipeline_mode<synchronous>, transform_indices = @transform_2, window_bounds = array<i64: 256, 128>}, {transform_indices = @transform_3, window_bounds = array<i64: 16, 128>}]} {
    %c0 = arith.constant 0 : index
    %c0_0 = arith.constant 0 : index
    %0 = vector.load %arg1[%c0, %c0_0] : memref<16x128xf32, #tpu.memory_space<vmem>>, vector<16x128xf32>
    %1 = arith.truncf %0 : vector<16x128xf32> to vector<16x128xbf16>
    %c0_1 = arith.constant 0 : index
    %c0_2 = arith.constant 0 : index
    %2 = vector.load %arg2[%c0_1, %c0_2] : memref<128x256xbf16, #tpu.memory_space<vmem>>, vector<128x256xbf16>
    %cst = arith.constant dense<0.000000e+00> : vector<16x256xf32>
    %3 = tpu.matmul %1, %2, %cst {dimension_numbers = #tpu.dot_dimension_numbers<[1], [0], [0], [1], [0, 0, 1, 1], [], []>} : vector<16x128xbf16>, vector<128x256xbf16>, vector<16x256xf32> -> vector<16x256xf32>
    %cst_3 = arith.constant 0.000000e+00 : f32
    %4 = vector.broadcast %cst_3 : f32 to vector<16x256xf32>
    %5 = arith.maximumf %3, %4 : vector<16x256xf32>
    %6 = arith.truncf %5 : vector<16x256xf32> to vector<16x256xbf16>
    %c0_4 = arith.constant 0 : index
    %c0_5 = arith.constant 0 : index
    %7 = vector.load %arg3[%c0_4, %c0_5] : memref<256x128xbf16, #tpu.memory_space<vmem>>, vector<256x128xbf16>
    %cst_6 = arith.constant dense<0.000000e+00> : vector<16x128xf32>
    %8 = tpu.matmul %6, %7, %cst_6 {dimension_numbers = #tpu.dot_dimension_numbers<[1], [0], [0], [1], [0, 0, 1, 1], [], []>} : vector<16x256xbf16>, vector<256x128xbf16>, vector<16x128xf32> -> vector<16x128xf32>
    %c0_7 = arith.constant 0 : index
    %c0_8 = arith.constant 0 : index
    %9 = vector.load %arg5[%c0_7, %c0_8] : memref<16x128xf32, #tpu.memory_space<vmem>>, vector<16x128xf32>
    tpu.vector_store %arg5[%c0_7, %c0_8], %8 {strides = array<i32>} : memref<16x128xf32, #tpu.memory_space<vmem>>, vector<16x128xf32>,
    %c0_9 = arith.constant 0 : index
    %c0_10 = arith.constant 0 : index
    %10 = vector.load %arg5[%c0_9, %c0_10] : memref<16x128xf32, #tpu.memory_space<vmem>>, vector<16x128xf32>
    %c0_11 = arith.constant 0 : index
    %c0_12 = arith.constant 0 : index
    %11 = vector.load %arg4[%c0_11, %c0_12] : memref<16x128xf32, #tpu.memory_space<vmem>>, vector<16x128xf32>
    tpu.vector_store %arg4[%c0_11, %c0_12], %10 {strides = array<i32>} : memref<16x128xf32, #tpu.memory_space<vmem>>, vector<16x128xf32>,
    return
  }
  func.func @transform_0(%arg0: i32) -> (i32, i32) {
    %c0_i32 = arith.constant 0 : i32
    %c0_i32_0 = arith.constant 0 : i32
    return %arg0, %c0_i32 : i32, i32
  }
  func.func @transform_1(%arg0: i32) -> (i32, i32) {
    %c0_i32 = arith.constant 0 : i32
    %c0_i32_0 = arith.constant 0 : i32
    %c0_i32_1 = arith.constant 0 : i32
    return %c0_i32, %c0_i32_0 : i32, i32
  }
  func.func @transform_2(%arg0: i32) -> (i32, i32) {
    %c0_i32 = arith.constant 0 : i32
    %c0_i32_0 = arith.constant 0 : i32
    %c0_i32_1 = arith.constant 0 : i32
    return %c0_i32, %c0_i32_0 : i32, i32
  }
  func.func @transform_3(%arg0: i32) -> (i32, i32) {
    %c0_i32 = arith.constant 0 : i32
    %c0_i32_0 = arith.constant 0 : i32
    return %arg0, %c0_i32 : i32, i32
  }
}

</mosaic_0001>

<llo_original>
// kernel: t5_dense_relu_dense.1
$region0: #{t5_dense_relu_dense.1}
  #allocation0 [shape = 'u32[]', space=smem, size = 0x4, offset = 0x4, fixed_abs, tag = 'smem constant byte address 0x4 - core index']
  #allocation1 [shape = 'u32[72,128]{1,0:T(1,128)}', space=vmem, size = 0x9000, scoped, tag = 'internal scratch']
  #allocation2 [shape = 'f32[16,128]{1,0:T(8,128)}', space=vmem, size = 0x2000, scoped, tag = 'scratch operand']
  %s0 = inlined_call_operand.vmem [shape: f32[16,128], index: 0, kind: input, shape index: {}]
  %s1 = inlined_call_operand.vmem [shape: bf16[128,256], index: 1, kind: input, shape index: {}]
  %s2 = inlined_call_operand.vmem [shape: bf16[256,128], index: 2, kind: input, shape index: {}]
  %s3 = inlined_call_operand.hbm [shape: f32[16,128], index: 3, kind: output, shape index: {}]
  %s4 = sld [smem:[#allocation0]]
  $region22: #{t5_dense_relu_dense.1} parent=0
    _
  %s6 = ssub.s32 1, %s4
  %s7 = scalar_select 0, %s6, %s4
  $region1: #{t5_dense_relu_dense.1} parent=0
    #allocation3 [shape = 'u8[8192]{0}', space=vmem, size = 0x2000, scoped, tag = 'output window, operand 0, single buffered']
    #allocation4 [shape = 's32[1]{0}', space=sflag, size = 0x4, scoped, tag = 'scoped memory for t5_dense_relu_dense.1']
    %8 = vsyncpa [#allocation4], 0
    // Predicated region
    $region2: #{t5_dense_relu_dense.1} parent=1 // pred_check
      _
    $region3: #{t5_dense_relu_dense.1} parent=1 // pred_check_branch
      %10 = sbr.rel (0) target = $region5
    $region4: #{t5_dense_relu_dense.1} parent=1 // pred_region
      _
    $region5: #{t5_dense_relu_dense.1} parent=1 // pred_fallthru
      _
    // Predicated region
    $region6: #{t5_dense_relu_dense.1} parent=1 // pred_check
      _
    $region7: #{t5_dense_relu_dense.1} parent=1 // pred_check_branch
      %12 = sbr.rel (0) target = $region9
    $region8: #{t5_dense_relu_dense.1} parent=1 // pred_region
      _
    $region9: #{t5_dense_relu_dense.1} parent=1 // pred_fallthru
      _
    // Predicated region
    $region10: #{t5_dense_relu_dense.1} parent=1 // pred_check
      _
    $region11: #{t5_dense_relu_dense.1} parent=1 // pred_check_branch
      %14 = sbr.rel (0) target = $region13
    $region12: #{t5_dense_relu_dense.1} parent=1 // pred_region
      _
    $region13: #{t5_dense_relu_dense.1} parent=1 // pred_fallthru
      _
    %v15 = vld [vmem:[%s0] sm:$0xff]
    %v16 = vld [vmem:[%s0 + $0x8] sm:$0xff]
    %v17 = vpack.c.bf16 %v16, %v15
    %v18 = vld [vmem:[%s1] sm:$0xff]
    %v19 = vld [vmem:[%s1 + $0x8] sm:$0xff]
    %v20 = vld [vmem:[%s1 + $0x10] sm:$0xff]
    %v21 = vld [vmem:[%s1 + $0x18] sm:$0xff]
    %v22 = vld [vmem:[%s1 + $0x20] sm:$0xff]
    %v23 = vld [vmem:[%s1 + $0x28] sm:$0xff]
    %v24 = vld [vmem:[%s1 + $0x30] sm:$0xff]
    %v25 = vld [vmem:[%s1 + $0x38] sm:$0xff]
    %v26 = vld [vmem:[%s1 + $0x40] sm:$0xff]
    %v27 = vld [vmem:[%s1 + $0x48] sm:$0xff]
    %v28 = vld [vmem:[%s1 + $0x50] sm:$0xff]
    %v29 = vld [vmem:[%s1 + $0x58] sm:$0xff]
    %v30 = vld [vmem:[%s1 + $0x60] sm:$0xff]
    %v31 = vld [vmem:[%s1 + $0x68] sm:$0xff]
    %v32 = vld [vmem:[%s1 + $0x70] sm:$0xff]
    %v33 = vld [vmem:[%s1 + $0x78] sm:$0xff]
    %v50 = vunpack.c.l.b16 %v18
    %v51 = vunpack.c.h.b16 %v18
    %v52 = vunpack.c.l.b16 %v19
    %v53 = vunpack.c.h.b16 %v19
    %v54 = vunpack.c.l.b16 %v20
    %v55 = vunpack.c.h.b16 %v20
    %v56 = vunpack.c.l.b16 %v21
    %v57 = vunpack.c.h.b16 %v21
    %v58 = vunpack.c.l.b16 %v22
    %v59 = vunpack.c.h.b16 %v22
    %v60 = vunpack.c.l.b16 %v23
    %v61 = vunpack.c.h.b16 %v23
    %v62 = vunpack.c.l.b16 %v24
    %v63 = vunpack.c.h.b16 %v24
    %v64 = vunpack.c.l.b16 %v25
    %v65 = vunpack.c.h.b16 %v25
    %v66 = vunpack.c.l.b16 %v26
    %v67 = vunpack.c.h.b16 %v26
    %v68 = vunpack.c.l.b16 %v27
    %v69 = vunpack.c.h.b16 %v27
    %v70 = vunpack.c.l.b16 %v28
    %v71 = vunpack.c.h.b16 %v28
    %v72 = vunpack.c.l.b16 %v29
    %v73 = vunpack.c.h.b16 %v29
    %v74 = vunpack.c.l.b16 %v30
    %v75 = vunpack.c.h.b16 %v30
    %v76 = vunpack.c.l.b16 %v31
    %v77 = vunpack.c.h.b16 %v31
    %v78 = vunpack.c.l.b16 %v32
    %v79 = vunpack.c.h.b16 %v32
    %v80 = vunpack.c.l.b16 %v33
    %v81 = vunpack.c.h.b16 %v33
    %v82 = vpack.c.b16 %v52, %v50
    %v83 = vpack.c.b16 %v53, %v51
    %v84 = vpack.c.b16 %v56, %v54
    %v85 = vpack.c.b16 %v57, %v55
    %v86 = vpack.c.b16 %v60, %v58
    %v87 = vpack.c.b16 %v61, %v59
    %v88 = vpack.c.b16 %v64, %v62
    %v89 = vpack.c.b16 %v65, %v63
    %v90 = vpack.c.b16 %v68, %v66
    %v91 = vpack.c.b16 %v69, %v67
    %v92 = vpack.c.b16 %v72, %v70
    %v93 = vpack.c.b16 %v73, %v71
    %v94 = vpack.c.b16 %v76, %v74
    %v95 = vpack.c.b16 %v77, %v75
    %v96 = vpack.c.b16 %v80, %v78
    %v97 = vpack.c.b16 %v81, %v79
    %114 = vmatpush.bf16.msra.mxu0 %v96
    %115 = vmatpush.bf16.msra.mxu0 %v94
    %116 = vmatpush.bf16.msra.mxu0 %v92
    %117 = vmatpush.bf16.msra.mxu0 %v90
    %118 = vmatpush.bf16.msra.mxu0 %v88
    %119 = vmatpush.bf16.msra.mxu0 %v86
    %120 = vmatpush.bf16.msra.mxu0 %v84
    %121 = vmatpush.bf16.msra.mxu0 %v82
    %122 = vmatmul.bf16.gmra.mxu0 %v17
    %v123 = vpop.f32.mrf.mxu0
    %v124 = vadd.f32 0.0, %v123
    %v125 = vpop.f32.mrf.mxu0
    %v126 = vadd.f32 0.0, %v125
    %127 = vdwg.mxu0
    %128 = vmatpush.bf16.msra.mxu0 %v97
    %129 = vmatpush.bf16.msra.mxu0 %v95
    %130 = vmatpush.bf16.msra.mxu0 %v93
    %131 = vmatpush.bf16.msra.mxu0 %v91
    %132 = vmatpush.bf16.msra.mxu0 %v89
    %133 = vmatpush.bf16.msra.mxu0 %v87
    %134 = vmatpush.bf16.msra.mxu0 %v85
    %135 = vmatpush.bf16.msra.mxu0 %v83
    %136 = vmatmul.bf16.gmra.mxu0 %v17
    %v137 = vpop.f32.mrf.mxu0
    %v138 = vadd.f32 0.0, %v137
    %v139 = vpop.f32.mrf.mxu0
    %v140 = vadd.f32 0.0, %v139
    %141 = vdwg.mxu0
    %v142 = vmax.f32 %v124, 0.0
    %v143 = vmax.f32 %v138, 0.0
    %v144 = vmax.f32 %v126, 0.0
    %v145 = vmax.f32 %v140, 0.0
    %v146 = vpack.c.bf16 %v144, %v142
    %v147 = vpack.c.bf16 %v145, %v143
    %v148 = vld [vmem:[%s2] sm:$0xf]
    %v149 = vld [vmem:[%s2 + $0x4] sm:$0xf]
    %v150 = vld [vmem:[%s2 + $0x8] sm:$0xf]
    %v151 = vld [vmem:[%s2 + $0xc] sm:$0xf]
    %v152 = vld [vmem:[%s2 + $0x10] sm:$0xf]
    %v153 = vld [vmem:[%s2 + $0x14] sm:$0xf]
    %v154 = vld [vmem:[%s2 + $0x18] sm:$0xf]
    %v155 = vld [vmem:[%s2 + $0x1c] sm:$0xf]
    %v156 = vld [vmem:[%s2 + $0x20] sm:$0xf]
    %v157 = vld [vmem:[%s2 + $0x24] sm:$0xf]
    %v158 = vld [vmem:[%s2 + $0x28] sm:$0xf]
    %v159 = vld [vmem:[%s2 + $0x2c] sm:$0xf]
    %v160 = vld [vmem:[%s2 + $0x30] sm:$0xf]
    %v161 = vld [vmem:[%s2 + $0x34] sm:$0xf]
    %v162 = vld [vmem:[%s2 + $0x38] sm:$0xf]
    %v163 = vld [vmem:[%s2 + $0x3c] sm:$0xf]
    %v164 = vld [vmem:[%s2 + $0x40] sm:$0xf]
    %v165 = vld [vmem:[%s2 + $0x44] sm:$0xf]
    %v166 = vld [vmem:[%s2 + $0x48] sm:$0xf]
    %v167 = vld [vmem:[%s2 + $0x4c] sm:$0xf]
    %v168 = vld [vmem:[%s2 + $0x50] sm:$0xf]
    %v169 = vld [vmem:[%s2 + $0x54] sm:$0xf]
    %v170 = vld [vmem:[%s2 + $0x58] sm:$0xf]
    %v171 = vld [vmem:[%s2 + $0x5c] sm:$0xf]
    %v172 = vld [vmem:[%s2 + $0x60] sm:$0xf]
    %v173 = vld [vmem:[%s2 + $0x64] sm:$0xf]
    %v174 = vld [vmem:[%s2 + $0x68] sm:$0xf]
    %v175 = vld [vmem:[%s2 + $0x6c] sm:$0xf]
    %v176 = vld [vmem:[%s2 + $0x70] sm:$0xf]
    %v177 = vld [vmem:[%s2 + $0x74] sm:$0xf]
    %v178 = vld [vmem:[%s2 + $0x78] sm:$0xf]
    %v179 = vld [vmem:[%s2 + $0x7c] sm:$0xf]
    %v212 = vunpack.c.l.b16 %v148
    %v213 = vunpack.c.l.b16 %v149
    %v214 = vunpack.c.l.b16 %v150
    %v215 = vunpack.c.l.b16 %v151
    %v216 = vunpack.c.l.b16 %v152
    %v217 = vunpack.c.l.b16 %v153
    %v218 = vunpack.c.l.b16 %v154
    %v219 = vunpack.c.l.b16 %v155
    %v220 = vunpack.c.l.b16 %v156
    %v221 = vunpack.c.l.b16 %v157
    %v222 = vunpack.c.l.b16 %v158
    %v223 = vunpack.c.l.b16 %v159
    %v224 = vunpack.c.l.b16 %v160
    %v225 = vunpack.c.l.b16 %v161
    %v226 = vunpack.c.l.b16 %v162
    %v227 = vunpack.c.l.b16 %v163
    %v228 = vunpack.c.l.b16 %v164
    %v229 = vunpack.c.l.b16 %v165
    %v230 = vunpack.c.l.b16 %v166
    %v231 = vunpack.c.l.b16 %v167
    %v232 = vunpack.c.l.b16 %v168
    %v233 = vunpack.c.l.b16 %v169
    %v234 = vunpack.c.l.b16 %v170
    %v235 = vunpack.c.l.b16 %v171
    %v236 = vunpack.c.l.b16 %v172
    %v237 = vunpack.c.l.b16 %v173
    %v238 = vunpack.c.l.b16 %v174
    %v239 = vunpack.c.l.b16 %v175
    %v240 = vunpack.c.l.b16 %v176
    %v241 = vunpack.c.l.b16 %v177
    %v242 = vunpack.c.l.b16 %v178
    %v243 = vunpack.c.l.b16 %v179
    %v244 = vpack.c.b16 %v213, %v212
    %v245 = vpack.c.b16 %v215, %v214
    %v246 = vpack.c.b16 %v217, %v216
    %v247 = vpack.c.b16 %v219, %v218
    %v248 = vpack.c.b16 %v221, %v220
    %v249 = vpack.c.b16 %v223, %v222
    %v250 = vpack.c.b16 %v225, %v224
    %v251 = vpack.c.b16 %v227, %v226
    %v252 = vpack.c.b16 %v229, %v228
    %v253 = vpack.c.b16 %v231, %v230
    %v254 = vpack.c.b16 %v233, %v232
    %v255 = vpack.c.b16 %v235, %v234
    %v256 = vpack.c.b16 %v237, %v236
    %v257 = vpack.c.b16 %v239, %v238
    %v258 = vpack.c.b16 %v241, %v240
    %v259 = vpack.c.b16 %v243, %v242
    %276 = vmatpush.bf16.msra.mxu0 %v251
    %277 = vmatpush.bf16.msra.mxu0 %v250
    %278 = vmatpush.bf16.msra.mxu0 %v249
    %279 = vmatpush.bf16.msra.mxu0 %v248
    %280 = vmatpush.bf16.msra.mxu0 %v247
    %281 = vmatpush.bf16.msra.mxu0 %v246
    %282 = vmatpush.bf16.msra.mxu0 %v245
    %283 = vmatpush.bf16.msra.mxu0 %v244
    %284 = vmatmul.bf16.gmra.mxu0 %v146
    %v285 = vpop.f32.mrf.mxu0
    %v286 = vadd.f32 0.0, %v285
    %v287 = vpop.f32.mrf.mxu0
    %v288 = vadd.f32 0.0, %v287
    %289 = vdwg.mxu0
    %290 = vmatpush.bf16.msra.mxu0 %v259
    %291 = vmatpush.bf16.msra.mxu0 %v258
    %292 = vmatpush.bf16.msra.mxu0 %v257
    %293 = vmatpush.bf16.msra.mxu0 %v256
    %294 = vmatpush.bf16.msra.mxu0 %v255
    %295 = vmatpush.bf16.msra.mxu0 %v254
    %296 = vmatpush.bf16.msra.mxu0 %v253
    %297 = vmatpush.bf16.msra.mxu0 %v252
    %298 = vmatmul.bf16.gmra.mxu0 %v147
    %v299 = vpop.f32.mrf.mxu0
    %v300 = vadd.f32 %v286, %v299
    %v301 = vpop.f32.mrf.mxu0
    %v302 = vadd.f32 %v288, %v301
    %303 = vdwg.mxu0
    %304 = vst [vmem:[#allocation2] sm:$0xff] %v300
    %305 = vst [vmem:[#allocation2 + $0x8] sm:$0xff] %v302
    %v306 = vld [vmem:[#allocation2] sm:$0xff]
    %v307 = vld [vmem:[#allocation2 + $0x8] sm:$0xff]
    %308 = vst [vmem:[#allocation3] sm:$0xff] %v306
    %309 = vst [vmem:[#allocation3 + $0x8] sm:$0xff] %v307
    // Predicated region
    $region14: #{t5_dense_relu_dense.1} parent=1 // pred_check
      _
    $region15: #{t5_dense_relu_dense.1} parent=1 // pred_check_branch
      %311 = sbr.rel (0) target = $region17
    $region16: #{t5_dense_relu_dense.1} parent=1 // pred_region
      %313 = vsyncadd [#allocation4], 0
      %s314 = sshll.u32 [#allocation3], 4
      %s315 = int_to_ptr.vmem [resolvable:$true] %s314
      %s316 = sshll.u32 %s3, 4
      %s317 = int_to_ptr.hbm [resolvable:$true] %s316
      %322 = dma.vmem_to_hbm [thread:$0]  %s315, 256, %s317, [#allocation4], 128, 128, 8
    $region17: #{t5_dense_relu_dense.1} parent=1 // pred_fallthru
      _
    // Predicated region
    $region18: #{t5_dense_relu_dense.1} parent=1 // pred_check
      _
    $region19: #{t5_dense_relu_dense.1} parent=1 // pred_check_branch
      %324 = sbr.rel (0) target = $region21
    $region20: #{t5_dense_relu_dense.1} parent=1 // pred_region
      %326 = dma.done [#allocation4], 256
    $region21: #{t5_dense_relu_dense.1} parent=1 // pred_fallthru
      _
    %327 = vsyncpa [#allocation4], 1

</llo_original>
